<compile_context>
chip_gen: v5e
topology: v5e:2x2
jax: 0.10.0
libtpu: 0.0.40
codegen_flags: <defaults>
</compile_context>

<pallas_src>
import functools

import jax
import jax.numpy as jnp
import numpy as np
from jax.experimental import pallas as pl
from jax.experimental.pallas import tpu as pltpu


def _round_up(x, m):
    return (x + m - 1) // m * m


def _pick_tb(batch, n_tokens, p_pad, c_true,
             max_rows=512, vmem_budget_bytes=14 * 1024 * 1024):
    """Largest TB dividing the batch such that TB*N rows per matmul sits in the
    256-512 sweet spot and the double-buffered input blocks fit a conservative
    VMEM budget (safe on v7x's 64 MiB; raise max_rows / budget on v5e / v6e
    which have 128 MiB physical VMEM)."""
    best = 1
    for tb in range(1, batch + 1):
        if batch % tb:
            continue
        rows = tb * n_tokens
        # double-buffered patches(bf16) + token_pred(bf16) + mask(f32) blocks
        in_bytes = 2 * rows * (p_pad * 2 + c_true * 2 + 4)
        if tb > 1 and (rows > max_rows or in_bytes > vmem_budget_bytes):
            continue
        best = tb
    return best


# ----------------------------------------------------------------------------
# Kernel 1: blocked teacher patch-embed + pool + masked token-loss partials.
# ----------------------------------------------------------------------------
def _teacher_token_kernel(patches_ref, w_emb_ref, tokp_ref, mask_ref,
                          pooled_ref, part_ref, *, mse_token):
    tb, n, p_pad = patches_ref.shape
    rows = tb * n
    c = tokp_ref.shape[2]

    # Teacher patch embed on (TB*N) rows: bf16 x bf16 -> f32 MXU accumulate.
    patches = patches_ref[...].reshape(rows, p_pad)              # bf16
    tokt = jnp.dot(patches, w_emb_ref[...],
                   preferred_element_type=jnp.float32)           # [rows, C_pad]
    c_pad = tokt.shape[1]

    # In-kernel mean pool per image; lane-dense [TB, 1, C_pad] write (padded
    # columns are exact zeros since w_emb's padded columns are zero).
    pooled_ref[...] = jnp.mean(tokt.reshape(tb, n, c_pad), axis=1, keepdims=True)

    # Token distillation partials, fused with the teacher forward (token_t is
    # never materialized in HBM).  token_pred arrives un-padded (width C) and
    # in bf16; math is done at width C so no lane-validity mask is needed.
    tokt_c = tokt if c_pad == c else tokt[:, :c]                 # [rows, C]
    tokp = tokp_ref[...].astype(jnp.float32).reshape(rows, c)    # [rows, C]
    maskv = mask_ref[...].reshape(rows, 1)                       # [rows, 1]
    keep = maskv > 0.5

    if mse_token:
        diff = tokp - tokt_c
        contrib = jnp.where(keep, diff * diff, 0.0)
    else:
        def lse_rows(x):
            m = jnp.max(x, axis=-1, keepdims=True)
            e = jnp.exp(x - m)
            s = jnp.sum(e, axis=-1, keepdims=True)
            return m + jnp.log(s), e, s

        lzp, _, _ = lse_rows(tokp)
        lzt, et, st = lse_rows(tokt_c)
        logp = tokp - lzp
        logt = tokt_c - lzt
        # Reuse exp() from the log-softmax; approx reciprocal -> idle EUP slot.
        pt = et * pl.reciprocal(st, approx=True)
        contrib = jnp.where(keep, pt * (logt - logp), 0.0)

    tok_sum = jnp.sum(contrib)
    n_kept = jnp.sum(keep.astype(jnp.float32))
    mask_sum = jnp.sum(maskv)

    slot = jax.lax.broadcasted_iota(jnp.int32, (1, 128), 1)
    part_ref[0] = jnp.where(slot == 0, tok_sum,
                  jnp.where(slot == 1, n_kept,
                  jnp.where(slot == 2, mask_sum, 0.0)))


def teacher_token_pallas(patches_p, w_emb_p, token_pred_b16, mask3, *,
                         mse_token, tb):
    B, N, P_pad = patches_p.shape
    C = token_pred_b16.shape[-1]
    C_pad = w_emb_p.shape[-1]
    nblk = B // tb
    kernel = functools.partial(_teacher_token_kernel, mse_token=bool(mse_token))
    pooled, parts = pl.pallas_call(
        kernel,
        grid=(nblk,),
        in_specs=[
            pl.BlockSpec((tb, N, P_pad), lambda b: (b, 0, 0)),
            pl.BlockSpec((P_pad, C_pad), lambda b: (0, 0)),      # grid-invariant
            pl.BlockSpec((tb, N, C), lambda b: (b, 0, 0)),       # un-padded, bf16
            pl.BlockSpec((tb, N, 1), lambda b: (b, 0, 0)),
        ],
        out_specs=(
            pl.BlockSpec((tb, 1, C_pad), lambda b: (b, 0, 0)),   # lane-dense
            pl.BlockSpec((1, 1, 128), lambda b: (b, 0, 0)),      # lane-dense
        ),
        out_shape=(
            jax.ShapeDtypeStruct((B, 1, C_pad), jnp.float32),
            jax.ShapeDtypeStruct((nblk, 1, 128), jnp.float32),
        ),
        compiler_params=pltpu.CompilerParams(
            dimension_semantics=("parallel",),
            vmem_limit_bytes=32 * 1024 * 1024),
    )(patches_p, w_emb_p, token_pred_b16, mask3)
    return pooled, parts


# ----------------------------------------------------------------------------
# Kernel 2: teacher cls head + CE + ratio + cls KL + token-partial combine.
# ----------------------------------------------------------------------------
def _final_loss_kernel(pred_ref, onehot_ref, pooled_ref, w_cls_ref, scores_ref,
                       kr_ref, part_ref, out_ref, *, num_classes, cls_weight,
                       ratio_weight, cls_distill_weight, token_distill_weight,
                       mse_token, token_dim):
    pred = pred_ref[...]                 # [B, NC_pad]  student cls logits
    onehot = onehot_ref[...]             # [B, NC_pad]  (zero in padded lanes)
    pooled3 = pooled_ref[...]            # [B, 1, C_pad]
    scores = scores_ref[...]             # [S, B, N]
    parts = part_ref[...]                # [nblk, 1, 128]
    B, nc_pad = pred.shape

    # Teacher cls head, moved out of the per-block kernel (one small matmul).
    pooled = pooled3.reshape(B, pooled3.shape[2])
    cls_t = jnp.dot(pooled, w_cls_ref[...],
                    preferred_element_type=jnp.float32)          # [B, NC_pad]

    lane = jax.lax.broadcasted_iota(jnp.int32, (1, nc_pad), 1)
    valid = lane < num_classes
    neg = jnp.float32(-1e30)

    def masked_lse(x):
        xm = jnp.where(valid, x, neg)
        m = jnp.max(xm, axis=-1, keepdims=True)
        e = jnp.where(valid, jnp.exp(xm - m), 0.0)
        s = jnp.sum(e, axis=-1, keepdims=True)
        return m + jnp.log(s), e, s

    # Base criterion: cross-entropy with hard labels (mean over batch).
    lzp, _, _ = masked_lse(pred)
    logp = pred - lzp                    # padded lanes finite; onehot zero there
    base_loss = -jnp.sum(onehot * logp) / B
    loss = base_loss * cls_weight

    # Keep-ratio loss, vectorized over pruning stages.
    m = jnp.mean(scores, axis=2)                          # [S, B]
    pred_loss = jnp.mean((m - kr_ref[...]) ** 2)          # == (1/S) sum_i mean_B
    loss = loss + pred_loss * ratio_weight

    # Cls distillation: KL(log_softmax(pred) || log_softmax(cls_t)),
    # log_target=True, reduction='batchmean'.  Exact reciprocal (free here).
    lzt, et, st = masked_lse(cls_t)
    logt = cls_t - lzt
    pt = et / st
    cls_kl = jnp.sum(pt * (logt - logp)) / B
    loss = loss + cls_distill_weight * cls_kl

    # Token distillation from per-block partials (NaN-safe: partials were
    # where()-masked element-wise, so tok_sum is exactly 0 when nothing kept).
    tok_sum = jnp.sum(parts[:, :, 0:1])
    n_kept = jnp.sum(parts[:, :, 1:2])
    mask_sum = jnp.sum(parts[:, :, 2:3])
    denom = jnp.maximum(n_kept, 1.0)
    if mse_token:
        tok_loss = tok_sum / (denom * token_dim)
    else:
        tok_loss = tok_sum / denom                        # batchmean over kept rows
    loss = loss + jnp.where(mask_sum < 0.1, 0.0,
                            token_distill_weight * tok_loss)

    out_ref[0, 0] = loss


def final_loss_pallas(pred_pad, onehot_pad, pooled, w_cls_pad, scores, kr,
                      parts, *, num_classes, cls_weight, ratio_weight,
                      cls_distill_weight, token_distill_weight, mse_token,
                      token_dim):
    kernel = functools.partial(
        _final_loss_kernel,
        num_classes=int(num_classes),
        cls_weight=float(cls_weight),
        ratio_weight=float(ratio_weight),
        cls_distill_weight=float(cls_distill_weight),
        token_distill_weight=float(token_distill_weight),
        mse_token=bool(mse_token),
        token_dim=int(token_dim))
    out = pl.pallas_call(
        kernel,
        out_shape=jax.ShapeDtypeStruct((1, 1), jnp.float32),
        in_specs=[pl.BlockSpec(memory_space=pltpu.MemorySpace.VMEM)] * 7,
        out_specs=pl.BlockSpec(memory_space=pltpu.MemorySpace.SMEM),
        compiler_params=pltpu.CompilerParams(vmem_limit_bytes=16 * 1024 * 1024),
    )(pred_pad, onehot_pad, pooled, w_cls_pad, scores, kr, parts)
    return out[0, 0]


# ----------------------------------------------------------------------------
# Glue (runs under jit, so pad/cast fuse with the patchify transpose).
# ----------------------------------------------------------------------------
def patchify_nchw(x, patch):
    B, Cin, H, W = x.shape
    nh, nw = H // patch, W // patch
    x = x.reshape(B, Cin, nh, patch, nw, patch)
    x = x.transpose(0, 2, 4, 1, 3, 5)                  # B, nh, nw, Cin, ph, pw
    return x.reshape(B, nh * nw, Cin * patch * patch)  # [B, N, P]


def dynamicvit_distillation_loss(inputs, pred, token_pred, mask, scores, labels,
                                 w_emb, w_cls, *, patch, keep_rate, cls_weight,
                                 ratio_weight, cls_distill_weight,
                                 token_distill_weight, mse_token):
    # TODO(synk): the real teacher nn.Module / base_criterion are external and
    # unspecified; a synthetic patch-embed + mean-pool + linear-head teacher
    # and hard-label cross-entropy stand in for them.
    B = inputs.shape[0]
    NC = pred.shape[-1]
    C = token_pred.shape[-1]
    S = scores.shape[0]
    assert len(keep_rate) == S

    patches = patchify_nchw(inputs, patch)             # [B, N, P]
    N, P = patches.shape[1], patches.shape[2]
    P_pad = _round_up(P, 128)
    C_pad = _round_up(C, 128)
    NC_pad = _round_up(NC, 128)

    # Pad + cast fuse with patchify's transpose under jit (no extra HBM trip).
    patches_p = jnp.pad(patches,
                        ((0, 0), (0, 0), (0, P_pad - P))).astype(jnp.bfloat16)
    w_emb_p = jnp.pad(w_emb,
                      ((0, P_pad - P), (0, C_pad - C))).astype(jnp.bfloat16)
    tokp_b16 = token_pred.astype(jnp.bfloat16)          # dominant HBM stream
    mask3 = mask.astype(jnp.float32)[:, :, None]

    tb = _pick_tb(B, N, P_pad, C)
    pooled, parts = teacher_token_pallas(
        patches_p, w_emb_p, tokp_b16, mask3, mse_token=mse_token, tb=tb)

    # Tiny, lane-dense kernel-2 inputs.
    pred_pad = jnp.pad(pred.astype(jnp.float32), ((0, 0), (0, NC_pad - NC)))
    onehot_pad = jax.nn.one_hot(labels, NC_pad, dtype=jnp.float32)
    w_cls_p = jnp.pad(w_cls.astype(jnp.float32),
                      ((0, C_pad - C), (0, NC_pad - NC)))
    kr = jnp.asarray(keep_rate, jnp.float32).reshape(S, 1)

    return final_loss_pallas(
        pred_pad, onehot_pad, pooled, w_cls_p, scores.astype(jnp.float32), kr,
        parts, num_classes=NC, cls_weight=cls_weight, ratio_weight=ratio_weight,
        cls_distill_weight=cls_distill_weight,
        token_distill_weight=token_distill_weight, mse_token=mse_token,
        token_dim=C)


# ----------------------------------------------------------------------------
# Pure-numpy reference (mirrors the PyTorch forward, incl. boolean gather)
# ----------------------------------------------------------------------------
def reference_loss(pred, labels, cls_t, token_pred, token_t, mask, scores,
                   keep_rate, cls_weight, ratio_weight, cls_distill_weight,
                   token_distill_weight, mse_token):
    def log_softmax(x):
        m = np.max(x, axis=-1, keepdims=True)
        return x - (m + np.log(np.sum(np.exp(x - m), axis=-1, keepdims=True)))

    B, _ = pred.shape
    logp = log_softmax(pred)
    base = -np.mean(logp[np.arange(B), labels])
    loss = base * cls_weight

    S = scores.shape[0]
    pl_ = 0.0
    for i in range(S):
        pl_ += np.mean((scores[i].mean(axis=1) - keep_rate[i]) ** 2)
    loss += (pl_ / S) * ratio_weight

    logt = log_softmax(cls_t)
    loss += cls_distill_weight * (np.sum(np.exp(logt) * (logt - logp)) / B)

    Bn, N, C = token_pred.shape
    bm = mask.reshape(Bn * N) > 0.5
    tp = token_pred.reshape(Bn * N, C)
    tt = token_t.reshape(Bn * N, C)
    if mask.sum() >= 0.1:
        tp_k, tt_k = tp[bm], tt[bm]
        if mse_token:
            tok_loss = np.mean((tp_k - tt_k) ** 2)
        else:
            lp_k = log_softmax(tp_k)
            lt_k = log_softmax(tt_k)
            tok_loss = np.sum(np.exp(lt_k) * (lt_k - lp_k)) / tp_k.shape[0]
        loss += token_distill_weight * tok_loss
    return loss


if __name__ == "__main__":
    key = jax.random.PRNGKey(0)
    B, Cin, H, W = 2, 3, 16, 16
    patch = 4
    N = (H // patch) * (W // patch)            # 16 tokens
    C = 32                                     # token embedding dim
    num_classes = 16
    S = 2                                      # pruning stages
    keep_rate = (0.7, 0.49)                    # model.token_ratio
    cls_weight = 1.0
    ratio_weight = 2.0
    cls_distill_weight = 0.5
    token_distill_weight = 0.5

    ks = jax.random.split(key, 8)
    inputs = jax.random.normal(ks[0], (B, Cin, H, W), jnp.float32)     # NCHW
    pred = jax.random.normal(ks[1], (B, num_classes), jnp.float32)
    token_pred = jax.random.normal(ks[2], (B, N, C), jnp.float32)
    mask = (jax.random.uniform(ks[3], (B, N)) > 0.4).astype(jnp.float32)
    scores = jax.random.uniform(ks[4], (S, B, N), dtype=jnp.float32)
    labels = jax.random.randint(ks[5], (B,), 0, num_classes)

    # Deterministic synthetic teacher params (the real teacher nn.Module is
    # unspecified in the original code; we use patch-embed + mean-pool + head).
    P = Cin * patch * patch
    w_emb = 0.1 * jax.random.normal(ks[6], (P, C), jnp.float32)
    w_cls = 0.1 * jax.random.normal(ks[7], (C, num_classes), jnp.float32)

    # numpy reference teacher / token path using the same bf16-rounded inputs
    # that the kernels see on the MXU and HBM streams.
    patches_np = np.asarray(
        patchify_nchw(inputs, patch).astype(jnp.bfloat16)).astype(np.float32)
    w_emb_np = np.asarray(w_emb.astype(jnp.bfloat16)).astype(np.float32)
    tok_ref = patches_np @ w_emb_np                                     # [B,N,C]
    cls_ref = tok_ref.mean(axis=1) @ np.asarray(w_cls)                  # [B,nc]
    token_pred_np = np.asarray(
        token_pred.astype(jnp.bfloat16)).astype(np.float32)

    cfg = dict(patch=patch, keep_rate=keep_rate, cls_weight=cls_weight,
               ratio_weight=ratio_weight,
               cls_distill_weight=cls_distill_weight,
               token_distill_weight=token_distill_weight)

    for mse_token in (True, False):
        loss_fn = jax.jit(functools.partial(dynamicvit_distillation_loss,
                                            mse_token=mse_token, **cfg))
        loss = jax.block_until_ready(
            loss_fn(inputs, pred, token_pred, mask, scores, labels, w_emb,
                    w_cls))

        ref = reference_loss(
            np.asarray(pred), np.asarray(labels), cls_ref,
            token_pred_np, tok_ref, np.asarray(mask), np.asarray(scores),
            keep_rate, cls_weight, ratio_weight, cls_distill_weight,
            token_distill_weight, mse_token)
        assert abs(float(loss) - float(ref)) <= 2e-3 * max(1.0, abs(float(ref))), (
            mse_token, float(loss), float(ref))

    print("KERNEL_OK")
</pallas_src>

<mosaic_0001>
module attributes {stable_mosaic.version = 11 : i64} {
  func.func @_final_loss_kernel(%arg0: memref<2x128xf32, #tpu.memory_space<vmem>>, %arg1: memref<2x128xf32, #tpu.memory_space<vmem>>, %arg2: memref<2x1x128xf32, #tpu.memory_space<vmem>>, %arg3: memref<128x128xf32, #tpu.memory_space<vmem>>, %arg4: memref<2x2x16xf32, #tpu.memory_space<vmem>>, %arg5: memref<2x1xf32, #tpu.memory_space<vmem>>, %arg6: memref<1x1x128xf32, #tpu.memory_space<vmem>>, %arg7: memref<1x1xf32, #tpu.memory_space<smem>>) attributes {dimension_semantics = [], scalar_prefetch = 0 : i64, scratch_operands = 0 : i64, tpu.core_type = #tpu.core_type<tc>} {
    %c0 = arith.constant 0 : index
    %c0_0 = arith.constant 0 : index
    %0 = vector.load %arg0[%c0, %c0_0] : memref<2x128xf32, #tpu.memory_space<vmem>>, vector<2x128xf32>
    %c0_1 = arith.constant 0 : index
    %c0_2 = arith.constant 0 : index
    %1 = vector.load %arg1[%c0_1, %c0_2] : memref<2x128xf32, #tpu.memory_space<vmem>>, vector<2x128xf32>
    %c0_3 = arith.constant 0 : index
    %c0_4 = arith.constant 0 : index
    %c0_5 = arith.constant 0 : index
    %2 = vector.load %arg2[%c0_3, %c0_4, %c0_5] : memref<2x1x128xf32, #tpu.memory_space<vmem>>, vector<2x1x128xf32>
    %c0_6 = arith.constant 0 : index
    %c0_7 = arith.constant 0 : index
    %c0_8 = arith.constant 0 : index
    %3 = vector.load %arg4[%c0_6, %c0_7, %c0_8] : memref<2x2x16xf32, #tpu.memory_space<vmem>>, vector<2x2x16xf32>
    %c0_9 = arith.constant 0 : index
    %c0_10 = arith.constant 0 : index
    %c0_11 = arith.constant 0 : index
    %4 = vector.load %arg6[%c0_9, %c0_10, %c0_11] : memref<1x1x128xf32, #tpu.memory_space<vmem>>, vector<1x1x128xf32>
    %5 = vector.shape_cast %2 : vector<2x1x128xf32> to vector<2x128xf32>
    %c0_12 = arith.constant 0 : index
    %c0_13 = arith.constant 0 : index
    %6 = vector.load %arg3[%c0_12, %c0_13] : memref<128x128xf32, #tpu.memory_space<vmem>>, vector<128x128xf32>
    %cst = arith.constant dense<0.000000e+00> : vector<2x128xf32>
    %7 = tpu.matmul %5, %6, %cst {dimension_numbers = #tpu.dot_dimension_numbers<[1], [0], [0], [1], [0, 0, 1, 1], [], []>} : vector<2x128xf32>, vector<128x128xf32>, vector<2x128xf32> -> vector<2x128xf32>
    %8 = tpu.iota {dimensions = array<i32: 1>} : vector<1x128xi32>
    %c16_i32 = arith.constant 16 : i32
    %9 = vector.broadcast %c16_i32 : i32 to vector<1x128xi32>
    %10 = arith.cmpi slt, %8, %9 : vector<1x128xi32>
    %cst_14 = arith.constant -1.000000e+30 : f32
    %11 = vector.shape_cast %10 : vector<1x128xi1> to vector<1x128xi1>
    %12 = vector.broadcast %11 : vector<1x128xi1> to vector<2x128xi1>
    %13 = vector.broadcast %cst_14 : f32 to vector<2x128xf32>
    %14 = arith.select %12, %0, %13 : vector<2x128xi1>, vector<2x128xf32>
    %cst_15 = arith.constant dense<0xFF800000> : vector<2xf32>
    %15 = vector.multi_reduction <maximumf>, %14, %cst_15 [1] : vector<2x128xf32> to vector<2xf32>
    %16 = vector.shape_cast %15 : vector<2xf32> to vector<2x1xf32>
    %17 = vector.broadcast %16 : vector<2x1xf32> to vector<2x128xf32>
    %18 = arith.subf %14, %17 : vector<2x128xf32>
    %19 = math.exp %18 : vector<2x128xf32>
    %cst_16 = arith.constant 0.000000e+00 : f32
    %20 = vector.shape_cast %10 : vector<1x128xi1> to vector<1x128xi1>
    %21 = vector.broadcast %20 : vector<1x128xi1> to vector<2x128xi1>
    %22 = vector.broadcast %cst_16 : f32 to vector<2x128xf32>
    %23 = arith.select %21, %19, %22 : vector<2x128xi1>, vector<2x128xf32>
    %cst_17 = arith.constant dense<0.000000e+00> : vector<2xf32>
    %24 = vector.multi_reduction <add>, %23, %cst_17 [1] : vector<2x128xf32> to vector<2xf32>
    %25 = vector.shape_cast %24 : vector<2xf32> to vector<2x1xf32>
    %26 = math.log %25 : vector<2x1xf32>
    %27 = arith.addf %16, %26 : vector<2x1xf32>
    %28 = vector.broadcast %27 : vector<2x1xf32> to vector<2x128xf32>
    %29 = arith.subf %0, %28 : vector<2x128xf32>
    %30 = arith.mulf %1, %29 : vector<2x128xf32>
    %31 = vector.shape_cast %30 : vector<2x128xf32> to vector<1x2x128xf32>
    %cst_18 = arith.constant dense<0.000000e+00> : vector<1xf32>
    %32 = vector.multi_reduction <add>, %31, %cst_18 [1, 2] : vector<1x2x128xf32> to vector<1xf32>
    %33 = vector.shape_cast %32 : vector<1xf32> to vector<1x1x1xf32>
    %34 = vector.extract %33[0, 0, 0] : f32 from vector<1x1x1xf32>
    %cst_19 = arith.constant 0.000000e+00 : f32
    %35 = arith.subf %cst_19, %34 : f32
    %cst_20 = arith.constant 2.000000e+00 : f32
    %36 = arith.divf %35, %cst_20 : f32
    %cst_21 = arith.constant 1.000000e+00 : f32
    %37 = arith.mulf %36, %cst_21 : f32
    %cst_22 = arith.constant dense<0.000000e+00> : vector<2x2xf32>
    %38 = vector.multi_reduction <add>, %3, %cst_22 [2] : vector<2x2x16xf32> to vector<2x2xf32>
    %cst_23 = arith.constant 1.600000e+01 : f32
    %39 = vector.broadcast %cst_23 : f32 to vector<2x2xf32>
    %40 = arith.divf %38, %39 : vector<2x2xf32>
    %c0_24 = arith.constant 0 : index
    %c0_25 = arith.constant 0 : index
    %41 = vector.load %arg5[%c0_24, %c0_25] : memref<2x1xf32, #tpu.memory_space<vmem>>, vector<2x1xf32>
    %42 = vector.broadcast %41 : vector<2x1xf32> to vector<2x2xf32>
    %43 = arith.subf %40, %42 : vector<2x2xf32>
    %44 = arith.mulf %43, %43 : vector<2x2xf32>
    %45 = vector.shape_cast %44 : vector<2x2xf32> to vector<1x2x2xf32>
    %cst_26 = arith.constant dense<0.000000e+00> : vector<1xf32>
    %46 = vector.multi_reduction <add>, %45, %cst_26 [1, 2] : vector<1x2x2xf32> to vector<1xf32>
    %47 = vector.shape_cast %46 : vector<1xf32> to vector<1x1x1xf32>
    %48 = vector.extract %47[0, 0, 0] : f32 from vector<1x1x1xf32>
    %cst_27 = arith.constant 4.000000e+00 : f32
    %49 = arith.divf %48, %cst_27 : f32
    %cst_28 = arith.constant 2.000000e+00 : f32
    %50 = arith.mulf %49, %cst_28 : f32
    %51 = arith.addf %37, %50 : f32
    %cst_29 = arith.constant -1.000000e+30 : f32
    %52 = vector.shape_cast %10 : vector<1x128xi1> to vector<1x128xi1>
    %53 = vector.broadcast %52 : vector<1x128xi1> to vector<2x128xi1>
    %54 = vector.broadcast %cst_29 : f32 to vector<2x128xf32>
    %55 = arith.select %53, %7, %54 : vector<2x128xi1>, vector<2x128xf32>
    %cst_30 = arith.constant dense<0xFF800000> : vector<2xf32>
    %56 = vector.multi_reduction <maximumf>, %55, %cst_30 [1] : vector<2x128xf32> to vector<2xf32>
    %57 = vector.shape_cast %56 : vector<2xf32> to vector<2x1xf32>
    %58 = vector.broadcast %57 : vector<2x1xf32> to vector<2x128xf32>
    %59 = arith.subf %55, %58 : vector<2x128xf32>
    %60 = math.exp %59 : vector<2x128xf32>
    %cst_31 = arith.constant 0.000000e+00 : f32
    %61 = vector.shape_cast %10 : vector<1x128xi1> to vector<1x128xi1>
    %62 = vector.broadcast %61 : vector<1x128xi1> to vector<2x128xi1>
    %63 = vector.broadcast %cst_31 : f32 to vector<2x128xf32>
    %64 = arith.select %62, %60, %63 : vector<2x128xi1>, vector<2x128xf32>
    %cst_32 = arith.constant dense<0.000000e+00> : vector<2xf32>
    %65 = vector.multi_reduction <add>, %64, %cst_32 [1] : vector<2x128xf32> to vector<2xf32>
    %66 = vector.shape_cast %65 : vector<2xf32> to vector<2x1xf32>
    %67 = math.log %66 : vector<2x1xf32>
    %68 = arith.addf %57, %67 : vector<2x1xf32>
    %69 = vector.broadcast %68 : vector<2x1xf32> to vector<2x128xf32>
    %70 = arith.subf %7, %69 : vector<2x128xf32>
    %71 = vector.broadcast %66 : vector<2x1xf32> to vector<2x128xf32>
    %72 = arith.divf %64, %71 : vector<2x128xf32>
    %73 = arith.subf %70, %29 : vector<2x128xf32>
    %74 = arith.mulf %72, %73 : vector<2x128xf32>
    %75 = vector.shape_cast %74 : vector<2x128xf32> to vector<1x2x128xf32>
    %cst_33 = arith.constant dense<0.000000e+00> : vector<1xf32>
    %76 = vector.multi_reduction <add>, %75, %cst_33 [1, 2] : vector<1x2x128xf32> to vector<1xf32>
    %77 = vector.shape_cast %76 : vector<1xf32> to vector<1x1x1xf32>
    %78 = vector.extract %77[0, 0, 0] : f32 from vector<1x1x1xf32>
    %cst_34 = arith.constant 2.000000e+00 : f32
    %79 = arith.divf %78, %cst_34 : f32
    %cst_35 = arith.constant 5.000000e-01 : f32
    %80 = arith.mulf %cst_35, %79 : f32
    %81 = arith.addf %51, %80 : f32
    %82 = vector.extract_strided_slice %4 {offsets = [0, 0, 0], sizes = [1, 1, 1], strides = [1, 1, 1]} : vector<1x1x128xf32> to vector<1x1x1xf32>
    %83 = vector.shape_cast %82 : vector<1x1x1xf32> to vector<1x1x1x1xf32>
    %cst_36 = arith.constant dense<0.000000e+00> : vector<1xf32>
    %84 = vector.multi_reduction <add>, %83, %cst_36 [1, 2, 3] : vector<1x1x1x1xf32> to vector<1xf32>
    %85 = vector.shape_cast %84 : vector<1xf32> to vector<1x1x1x1xf32>
    %86 = vector.extract %85[0, 0, 0, 0] : f32 from vector<1x1x1x1xf32>
    %87 = vector.extract_strided_slice %4 {offsets = [0, 0, 1], sizes = [1, 1, 1], strides = [1, 1, 1]} : vector<1x1x128xf32> to vector<1x1x1xf32>
    %88 = vector.shape_cast %87 : vector<1x1x1xf32> to vector<1x1x1x1xf32>
    %cst_37 = arith.constant dense<0.000000e+00> : vector<1xf32>
    %89 = vector.multi_reduction <add>, %88, %cst_37 [1, 2, 3] : vector<1x1x1x1xf32> to vector<1xf32>
    %90 = vector.shape_cast %89 : vector<1xf32> to vector<1x1x1x1xf32>
    %91 = vector.extract %90[0, 0, 0, 0] : f32 from vector<1x1x1x1xf32>
    %92 = vector.extract_strided_slice %4 {offsets = [0, 0, 2], sizes = [1, 1, 1], strides = [1, 1, 1]} : vector<1x1x128xf32> to vector<1x1x1xf32>
    %93 = vector.shape_cast %92 : vector<1x1x1xf32> to vector<1x1x1x1xf32>
    %cst_38 = arith.constant dense<0.000000e+00> : vector<1xf32>
    %94 = vector.multi_reduction <add>, %93, %cst_38 [1, 2, 3] : vector<1x1x1x1xf32> to vector<1xf32>
    %95 = vector.shape_cast %94 : vector<1xf32> to vector<1x1x1x1xf32>
    %96 = vector.extract %95[0, 0, 0, 0] : f32 from vector<1x1x1x1xf32>
    %cst_39 = arith.constant 1.000000e+00 : f32
    %97 = arith.maximumf %91, %cst_39 : f32
    %cst_40 = arith.constant 3.200000e+01 : f32
    %98 = arith.mulf %97, %cst_40 : f32
    %99 = arith.divf %86, %98 : f32
    %cst_41 = arith.constant 1.000000e-01 : f32
    %100 = arith.cmpf olt, %96, %cst_41 : f32
    %cst_42 = arith.constant 5.000000e-01 : f32
    %101 = arith.mulf %cst_42, %99 : f32
    %cst_43 = arith.constant 0.000000e+00 : f32
    %102 = arith.select %100, %cst_43, %101 : f32
    %103 = arith.addf %81, %102 : f32
    %c0_44 = arith.constant 0 : index
    %c0_45 = arith.constant 0 : index
    %104 = memref.load %arg7[%c0_44, %c0_45] : memref<1x1xf32, #tpu.memory_space<smem>>
    memref.store %103, %arg7[%c0_44, %c0_45] : memref<1x1xf32, #tpu.memory_space<smem>>
    return
  }
}

module attributes {stable_mosaic.version = 11 : i64} {
  func.func @_teacher_token_kernel(%arg0: i32, %arg1: memref<2x16x128xbf16, #tpu.memory_space<vmem>>, %arg2: memref<128x128xbf16, #tpu.memory_space<vmem>>, %arg3: memref<2x16x32xbf16, #tpu.memory_space<vmem>>, %arg4: memref<2x16x1xf32, #tpu.memory_space<vmem>>, %arg5: memref<2x1x128xf32, #tpu.memory_space<vmem>>, %arg6: memref<1x1x128xf32, #tpu.memory_space<vmem>>) attributes {dimension_semantics = [#tpu.dimension_semantics<parallel>], iteration_bounds = array<i64: 1>, scalar_prefetch = 0 : i64, scratch_operands = 0 : i64, tpu.core_type = #tpu.core_type<tc>, window_params = [{transform_indices = @transform_0, window_bounds = array<i64: 2, 16, 128>}, {pipeline_mode = #tpu.pipeline_mode<synchronous>, transform_indices = @transform_1, window_bounds = array<i64: 128, 128>}, {transform_indices = @transform_2, window_bounds = array<i64: 2, 16, 32>}, {transform_indices = @transform_3, window_bounds = array<i64: 2, 16, 1>}, {transform_indices = @transform_4, window_bounds = array<i64: 2, 1, 128>}, {transform_indices = @transform_5, window_bounds = array<i64: 1, 1, 128>}]} {
    %c0 = arith.constant 0 : index
    %c0_0 = arith.constant 0 : index
    %c0_1 = arith.constant 0 : index
    %0 = vector.load %arg1[%c0, %c0_0, %c0_1] : memref<2x16x128xbf16, #tpu.memory_space<vmem>>, vector<2x16x128xbf16>
    %1 = vector.shape_cast %0 : vector<2x16x128xbf16> to vector<32x128xbf16>
    %c0_2 = arith.constant 0 : index
    %c0_3 = arith.constant 0 : index
    %2 = vector.load %arg2[%c0_2, %c0_3] : memref<128x128xbf16, #tpu.memory_space<vmem>>, vector<128x128xbf16>
    %cst = arith.constant dense<0.000000e+00> : vector<32x128xf32>
    %3 = tpu.matmul %1, %2, %cst {dimension_numbers = #tpu.dot_dimension_numbers<[1], [0], [0], [1], [0, 0, 1, 1], [], []>} : vector<32x128xbf16>, vector<128x128xbf16>, vector<32x128xf32> -> vector<32x128xf32>
    %4 = vector.shape_cast %3 : vector<32x128xf32> to vector<2x16x128xf32>
    %cst_4 = arith.constant dense<0.000000e+00> : vector<2x128xf32>
    %5 = vector.multi_reduction <add>, %4, %cst_4 [1] : vector<2x16x128xf32> to vector<2x128xf32>
    %6 = vector.shape_cast %5 : vector<2x128xf32> to vector<2x1x128xf32>
    %cst_5 = arith.constant 1.600000e+01 : f32
    %7 = vector.broadcast %cst_5 : f32 to vector<2x1x128xf32>
    %8 = arith.divf %6, %7 : vector<2x1x128xf32>
    %c0_6 = arith.constant 0 : index
    %c0_7 = arith.constant 0 : index
    %c0_8 = arith.constant 0 : index
    %9 = vector.load %arg5[%c0_6, %c0_7, %c0_8] : memref<2x1x128xf32, #tpu.memory_space<vmem>>, vector<2x1x128xf32>
    tpu.vector_store %arg5[%c0_6, %c0_7, %c0_8], %8 {strides = array<i32>} : memref<2x1x128xf32, #tpu.memory_space<vmem>>, vector<2x1x128xf32>,
    %10 = vector.extract_strided_slice %3 {offsets = [0, 0], sizes = [32, 32], strides = [1, 1]} : vector<32x128xf32> to vector<32x32xf32>
    %c0_9 = arith.constant 0 : index
    %c0_10 = arith.constant 0 : index
    %c0_11 = arith.constant 0 : index
    %11 = vector.load %arg3[%c0_9, %c0_10, %c0_11] : memref<2x16x32xbf16, #tpu.memory_space<vmem>>, vector<2x16x32xbf16>
    %12 = arith.extf %11 : vector<2x16x32xbf16> to vector<2x16x32xf32>
    %13 = vector.shape_cast %12 : vector<2x16x32xf32> to vector<32x32xf32>
    %c0_12 = arith.constant 0 : index
    %c0_13 = arith.constant 0 : index
    %c0_14 = arith.constant 0 : index
    %14 = vector.load %arg4[%c0_12, %c0_13, %c0_14] : memref<2x16x1xf32, #tpu.memory_space<vmem>>, vector<2x16x1xf32>
    %15 = vector.shape_cast %14 : vector<2x16x1xf32> to vector<32x1xf32>
    %cst_15 = arith.constant 5.000000e-01 : f32
    %16 = vector.broadcast %cst_15 : f32 to vector<32x1xf32>
    %17 = arith.cmpf ogt, %15, %16 : vector<32x1xf32>
    %18 = arith.subf %13, %10 : vector<32x32xf32>
    %19 = arith.mulf %18, %18 : vector<32x32xf32>
    %cst_16 = arith.constant 0.000000e+00 : f32
    %20 = vector.shape_cast %17 : vector<32x1xi1> to vector<32x1xi1>
    %21 = vector.broadcast %20 : vector<32x1xi1> to vector<32x32xi1>
    %22 = vector.broadcast %cst_16 : f32 to vector<32x32xf32>
    %23 = arith.select %21, %19, %22 : vector<32x32xi1>, vector<32x32xf32>
    %24 = vector.shape_cast %23 : vector<32x32xf32> to vector<1x32x32xf32>
    %cst_17 = arith.constant dense<0.000000e+00> : vector<1xf32>
    %25 = vector.multi_reduction <add>, %24, %cst_17 [1, 2] : vector<1x32x32xf32> to vector<1xf32>
    %26 = vector.shape_cast %25 : vector<1xf32> to vector<1x1x1xf32>
    %27 = vector.extract %26[0, 0, 0] : f32 from vector<1x1x1xf32>
    %28 = arith.extui %17 : vector<32x1xi1> to vector<32x1xi32>
    %29 = arith.sitofp %28 : vector<32x1xi32> to vector<32x1xf32>
    %30 = vector.shape_cast %29 : vector<32x1xf32> to vector<1x32x1xf32>
    %cst_18 = arith.constant dense<0.000000e+00> : vector<1xf32>
    %31 = vector.multi_reduction <add>, %30, %cst_18 [1, 2] : vector<1x32x1xf32> to vector<1xf32>
    %32 = vector.shape_cast %31 : vector<1xf32> to vector<1x1x1xf32>
    %33 = vector.extract %32[0, 0, 0] : f32 from vector<1x1x1xf32>
    %34 = vector.shape_cast %15 : vector<32x1xf32> to vector<1x32x1xf32>
    %cst_19 = arith.constant dense<0.000000e+00> : vector<1xf32>
    %35 = vector.multi_reduction <add>, %34, %cst_19 [1, 2] : vector<1x32x1xf32> to vector<1xf32>
    %36 = vector.shape_cast %35 : vector<1xf32> to vector<1x1x1xf32>
    %37 = vector.extract %36[0, 0, 0] : f32 from vector<1x1x1xf32>
    %38 = tpu.iota {dimensions = array<i32: 1>} : vector<1x128xi32>
    %c0_i32 = arith.constant 0 : i32
    %39 = vector.broadcast %c0_i32 : i32 to vector<1x128xi32>
    %40 = arith.cmpi eq, %38, %39 : vector<1x128xi32>
    %c1_i32 = arith.constant 1 : i32
    %41 = vector.broadcast %c1_i32 : i32 to vector<1x128xi32>
    %42 = arith.cmpi eq, %38, %41 : vector<1x128xi32>
    %c2_i32 = arith.constant 2 : i32
    %43 = vector.broadcast %c2_i32 : i32 to vector<1x128xi32>
    %44 = arith.cmpi eq, %38, %43 : vector<1x128xi32>
    %cst_20 = arith.constant 0.000000e+00 : f32
    %45 = vector.broadcast %37 : f32 to vector<1x128xf32>
    %46 = vector.broadcast %cst_20 : f32 to vector<1x128xf32>
    %47 = arith.select %44, %45, %46 : vector<1x128xi1>, vector<1x128xf32>
    %48 = vector.broadcast %33 : f32 to vector<1x128xf32>
    %49 = arith.select %42, %48, %47 : vector<1x128xi1>, vector<1x128xf32>
    %50 = vector.broadcast %27 : f32 to vector<1x128xf32>
    %51 = arith.select %40, %50, %49 : vector<1x128xi1>, vector<1x128xf32>
    %c0_21 = arith.constant 0 : index
    %c0_22 = arith.constant 0 : index
    %c0_23 = arith.constant 0 : index
    %52 = vector.load %arg6[%c0_21, %c0_22, %c0_23] : memref<1x1x128xf32, #tpu.memory_space<vmem>>, vector<1x1x128xf32>
    %53 = vector.shape_cast %52 : vector<1x1x128xf32> to vector<1x128xf32>
    %54 = vector.shape_cast %51 : vector<1x128xf32> to vector<1x1x128xf32>
    tpu.vector_store %arg6[%c0_21, %c0_22, %c0_23], %54 {strides = array<i32>} : memref<1x1x128xf32, #tpu.memory_space<vmem>>, vector<1x1x128xf32>,
    return
  }
  func.func @transform_0(%arg0: i32) -> (i32, i32, i32) {
    %c0_i32 = arith.constant 0 : i32
    %c0_i32_0 = arith.constant 0 : i32
    %c0_i32_1 = arith.constant 0 : i32
    return %arg0, %c0_i32, %c0_i32_0 : i32, i32, i32
  }
  func.func @transform_1(%arg0: i32) -> (i32, i32) {
    %c0_i32 = arith.constant 0 : i32
    %c0_i32_0 = arith.constant 0 : i32
    %c0_i32_1 = arith.constant 0 : i32
    return %c0_i32, %c0_i32_0 : i32, i32
  }
  func.func @transform_2(%arg0: i32) -> (i32, i32, i32) {
    %c0_i32 = arith.constant 0 : i32
    %c0_i32_0 = arith.constant 0 : i32
    %c0_i32_1 = arith.constant 0 : i32
    return %arg0, %c0_i32, %c0_i32_0 : i32, i32, i32
  }
  func.func @transform_3(%arg0: i32) -> (i32, i32, i32) {
    %c0_i32 = arith.constant 0 : i32
    %c0_i32_0 = arith.constant 0 : i32
    %c0_i32_1 = arith.constant 0 : i32
    return %arg0, %c0_i32, %c0_i32_0 : i32, i32, i32
  }
  func.func @transform_4(%arg0: i32) -> (i32, i32, i32) {
    %c0_i32 = arith.constant 0 : i32
    %c0_i32_0 = arith.constant 0 : i32
    %c0_i32_1 = arith.constant 0 : i32
    return %arg0, %c0_i32, %c0_i32_0 : i32, i32, i32
  }
  func.func @transform_5(%arg0: i32) -> (i32, i32, i32) {
    %c0_i32 = arith.constant 0 : i32
    %c0_i32_0 = arith.constant 0 : i32
    %c0_i32_1 = arith.constant 0 : i32
    return %arg0, %c0_i32, %c0_i32_0 : i32, i32, i32
  }
}

</mosaic_0001>

<llo_original>
// kernel: dynamicvit_distillation_loss.2
$region0: #{dynamicvit_distillation_loss.2}
  #allocation0 [shape = 'u32[]', space=smem, size = 0x4, offset = 0x4, fixed_abs, tag = 'smem constant byte address 0x4 - core index']
  #allocation1 [shape = 'u32[72,128]{1,0:T(1,128)}', space=vmem, size = 0x9000, scoped, tag = 'internal scratch']
  %s0 = inlined_call_operand.vmem [shape: bf16[2,16,128], index: 0, kind: input, shape index: {}]
  %s1 = inlined_call_operand.vmem [shape: bf16[128,128], index: 1, kind: input, shape index: {}]
  %s2 = inlined_call_operand.vmem [shape: bf16[2,16,32], index: 2, kind: input, shape index: {}]
  %s3 = inlined_call_operand.vmem [shape: f32[2,16,1], index: 3, kind: input, shape index: {}]
  %s4 = inlined_call_operand.vmem [shape: f32[2,1,128], index: 4, kind: output, shape index: {0}]
  %s5 = inlined_call_operand.vmem [shape: f32[1,1,128], index: 5, kind: output, shape index: {1}]
  %6 = xla_tuple %s4, %s5
  %s7 = sld [smem:[#allocation0]]
  $region34: #{dynamicvit_distillation_loss.2} parent=0
    _
  %s9 = ssub.s32 1, %s7
  %s10 = scalar_select 0, %s9, %s7
  // Predicated region
  $region2: #{dynamicvit_distillation_loss.2} parent=0 // pred_check
    _
  $region3: #{dynamicvit_distillation_loss.2} parent=0 // pred_check_branch
    %12 = sbr.rel (0) target = $region5
  $region4: #{dynamicvit_distillation_loss.2} parent=0 // pred_region
    _
  $region5: #{dynamicvit_distillation_loss.2} parent=0 // pred_fallthru
    _
  // Predicated region
  $region6: #{dynamicvit_distillation_loss.2} parent=0 // pred_check
    _
  $region7: #{dynamicvit_distillation_loss.2} parent=0 // pred_check_branch
    %14 = sbr.rel (0) target = $region9
  $region8: #{dynamicvit_distillation_loss.2} parent=0 // pred_region
    _
  $region9: #{dynamicvit_distillation_loss.2} parent=0 // pred_fallthru
    _
  // Predicated region
  $region10: #{dynamicvit_distillation_loss.2} parent=0 // pred_check
    _
  $region11: #{dynamicvit_distillation_loss.2} parent=0 // pred_check_branch
    %16 = sbr.rel (0) target = $region13
  $region12: #{dynamicvit_distillation_loss.2} parent=0 // pred_region
    _
  $region13: #{dynamicvit_distillation_loss.2} parent=0 // pred_fallthru
    _
  // Predicated region
  $region14: #{dynamicvit_distillation_loss.2} parent=0 // pred_check
    _
  $region15: #{dynamicvit_distillation_loss.2} parent=0 // pred_check_branch
    %18 = sbr.rel (0) target = $region17
  $region16: #{dynamicvit_distillation_loss.2} parent=0 // pred_region
    _
  $region17: #{dynamicvit_distillation_loss.2} parent=0 // pred_fallthru
    _
  %v19 = vld [vmem:[%s0] sm:$0xf]
  %v20 = vld [vmem:[%s0 + $0x4] sm:$0xf]
  %v21 = vld [vmem:[%s0 + $0x8] sm:$0xf]
  %v22 = vld [vmem:[%s0 + $0xc] sm:$0xf]
  %v23 = vld [vmem:[%s1] sm:$0xf]
  %v24 = vld [vmem:[%s1 + $0x4] sm:$0xf]
  %v25 = vld [vmem:[%s1 + $0x8] sm:$0xf]
  %v26 = vld [vmem:[%s1 + $0xc] sm:$0xf]
  %v27 = vld [vmem:[%s1 + $0x10] sm:$0xf]
  %v28 = vld [vmem:[%s1 + $0x14] sm:$0xf]
  %v29 = vld [vmem:[%s1 + $0x18] sm:$0xf]
  %v30 = vld [vmem:[%s1 + $0x1c] sm:$0xf]
  %v31 = vld [vmem:[%s1 + $0x20] sm:$0xf]
  %v32 = vld [vmem:[%s1 + $0x24] sm:$0xf]
  %v33 = vld [vmem:[%s1 + $0x28] sm:$0xf]
  %v34 = vld [vmem:[%s1 + $0x2c] sm:$0xf]
  %v35 = vld [vmem:[%s1 + $0x30] sm:$0xf]
  %v36 = vld [vmem:[%s1 + $0x34] sm:$0xf]
  %v37 = vld [vmem:[%s1 + $0x38] sm:$0xf]
  %v38 = vld [vmem:[%s1 + $0x3c] sm:$0xf]
  %v43 = vunpack.c.l.b16 %v19
  %v44 = vunpack.c.l.b16 %v20
  %v45 = vunpack.c.l.b16 %v21
  %v46 = vunpack.c.l.b16 %v22
  %v47 = vpack.c.b16 %v44, %v43
  %v48 = vpack.c.b16 %v46, %v45
  %v67 = vunpack.c.l.b16 %v23
  %v68 = vunpack.c.l.b16 %v24
  %v69 = vunpack.c.l.b16 %v25
  %v70 = vunpack.c.l.b16 %v26
  %v71 = vunpack.c.l.b16 %v27
  %v72 = vunpack.c.l.b16 %v28
  %v73 = vunpack.c.l.b16 %v29
  %v74 = vunpack.c.l.b16 %v30
  %v75 = vunpack.c.l.b16 %v31
  %v76 = vunpack.c.l.b16 %v32
  %v77 = vunpack.c.l.b16 %v33
  %v78 = vunpack.c.l.b16 %v34
  %v79 = vunpack.c.l.b16 %v35
  %v80 = vunpack.c.l.b16 %v36
  %v81 = vunpack.c.l.b16 %v37
  %v82 = vunpack.c.l.b16 %v38
  %v83 = vpack.c.b16 %v68, %v67
  %v84 = vpack.c.b16 %v70, %v69
  %v85 = vpack.c.b16 %v72, %v71
  %v86 = vpack.c.b16 %v74, %v73
  %v87 = vpack.c.b16 %v76, %v75
  %v88 = vpack.c.b16 %v78, %v77
  %v89 = vpack.c.b16 %v80, %v79
  %v90 = vpack.c.b16 %v82, %v81
  %99 = vmatpush.bf16.msra.mxu0 %v90
  %100 = vmatpush.bf16.msra.mxu0 %v89
  %101 = vmatpush.bf16.msra.mxu0 %v88
  %102 = vmatpush.bf16.msra.mxu0 %v87
  %103 = vmatpush.bf16.msra.mxu0 %v86
  %104 = vmatpush.bf16.msra.mxu0 %v85
  %105 = vmatpush.bf16.msra.mxu0 %v84
  %106 = vmatpush.bf16.msra.mxu0 %v83
  %107 = vmatmul.bf16.gmra.mxu0 %v47
  %v108 = vpop.f32.mrf.mxu0
  %v109 = vadd.f32 0.0, %v108
  %v110 = vpop.f32.mrf.mxu0
  %v111 = vadd.f32 0.0, %v110
  %112 = vmatmul.bf16.gmra.mxu0 %v48
  %v113 = vpop.f32.mrf.mxu0
  %v114 = vadd.f32 0.0, %v113
  %v115 = vpop.f32.mrf.mxu0
  %v116 = vadd.f32 0.0, %v115
  %117 = vdwg.mxu0
  %v118 = vadd.f32 %v109, %v111
  %v119 = vrot.slane %v118, 4
  %v120 = vadd.f32 %v118, %v119
  %v121 = vrot.slane %v120, 2
  %v122 = vadd.f32 %v120, %v121
  %v123 = vrot.slane %v122, 1
  %v124 = vadd.f32 %v122, %v123
  %v125 = vadd.f32 %v114, %v116
  %v126 = vrot.slane %v125, 4
  %v127 = vadd.f32 %v125, %v126
  %v128 = vrot.slane %v127, 2
  %v129 = vadd.f32 %v127, %v128
  %v130 = vrot.slane %v129, 1
  %v131 = vadd.f32 %v129, %v130
  %v132 = vrcp.pop 16.0
  %v133 = vmul.f32 16.0, %v132
  %v134 = vsub.f32 1.0, %v133
  %v135 = vmul.f32 %v132, %v134
  %v136 = vadd.f32 %v132, %v135
  %vm137 = vweird.f32 %v132
  %v138 = vsel %vm137, %v132, %v136
  %v139 = vmul.f32 %v124, %v138
  %v140 = vmul.f32 %v131, %v138
  %141 = vst [vmem:[%s4] sm:$0x1] %v139
  %142 = vst [vmem:[%s4 + $0x1] sm:$0x1] %v140
  %v143 = vld [vmem:[%s2] sm:$0xf]
  %v144 = vld [vmem:[%s2 + $0x4] sm:$0xf]
  %v145 = vld [vmem:[%s2 + $0x8] sm:$0xf]
  %v146 = vld [vmem:[%s2 + $0xc] sm:$0xf]
  %v147 = vunpack.c.l.bf16 %v143
  %v148 = vunpack.c.l.bf16 %v144
  %v149 = vunpack.c.l.bf16 %v145
  %v150 = vunpack.c.l.bf16 %v146
  %v151 = vld [vmem:[%s3] sm:$0xff]
  %v152 = vld [vmem:[%s3 + $0x8] sm:$0xff]
  %v153 = vld [vmem:[%s3 + $0x10] sm:$0xff]
  %v154 = vld [vmem:[%s3 + $0x18] sm:$0xff]
  %vm155 = vcmp.gt.f32.partialorder %v151, 0.5
  %vm156 = vcmp.gt.f32.partialorder %v152, 0.5
  %vm157 = vcmp.gt.f32.partialorder %v153, 0.5
  %vm158 = vcmp.gt.f32.partialorder %v154, 0.5
  %v159 = vsub.f32 %v147, %v109
  %v160 = vsub.f32 %v148, %v111
  %v161 = vsub.f32 %v149, %v114
  %v162 = vsub.f32 %v150, %v116
  %v163 = vmul.f32 %v159, %v159
  %v164 = vmul.f32 %v160, %v160
  %v165 = vmul.f32 %v161, %v161
  %v166 = vmul.f32 %v162, %v162
  %v167 = vsel %vm155, 1, 0
  %v168 = vsel %vm156, 1, 0
  %v169 = vsel %vm157, 1, 0
  %v170 = vsel %vm158, 1, 0
  %171 = vset.pattern.permute.xlu0 0
  %172 = vperm.xlu0 %171, %v167
  %v173 = vpop.permute.xlu0 %172
  %174 = vset.pattern.permute.xlu0 0
  %175 = vperm.xlu0 %174, %v168
  %v176 = vpop.permute.xlu0 %175
  %177 = vset.pattern.permute.xlu0 0
  %178 = vperm.xlu0 %177, %v169
  %v179 = vpop.permute.xlu0 %178
  %180 = vset.pattern.permute.xlu0 0
  %181 = vperm.xlu0 %180, %v170
  %v182 = vpop.permute.xlu0 %181
  %vm183 = vcmp.eq.s32.totalorder %v173, 1
  %vm184 = vcmp.eq.s32.totalorder %v176, 1
  %vm185 = vcmp.eq.s32.totalorder %v179, 1
  %vm186 = vcmp.eq.s32.totalorder %v182, 1
  %v187 = vsel %vm183, %v163, 0.0
  %v188 = vsel %vm184, %v164, 0.0
  %v189 = vsel %vm185, %v165, 0.0
  %v190 = vsel %vm186, %v166, 0.0
  %vm191 = vcmask 261120
  %v192 = vsel %vm191, %v187, 0.0
  %v193 = vsel %vm191, %v188, 0.0
  %v194 = vadd.f32 %v192, %v193
  %v195 = vsel %vm191, %v189, 0.0
  %v196 = vadd.f32 %v194, %v195
  %v197 = vsel %vm191, %v190, 0.0
  %v198 = vadd.f32 %v196, %v197
  %199 = vadd.xlane.f32.xlu0 %v198
  %v200 = vpop.xlane.xlu0 %199
  %v201 = vrot.slane %v200, 4
  %v202 = vadd.f32 %v200, %v201
  %v203 = vrot.slane %v202, 2
  %v204 = vadd.f32 %v202, %v203
  %v205 = vrot.slane %v204, 1
  %v206 = vadd.f32 %v204, %v205
  %s207 = vtos %v206
  %v208 = vcvt.s32.f32 %v167
  %v209 = vcvt.s32.f32 %v168
  %v210 = vcvt.s32.f32 %v169
  %v211 = vcvt.s32.f32 %v170
  %vm212 = vcmask 7168
  %v213 = vsel %vm212, %v208, 0.0
  %v214 = vsel %vm212, %v209, 0.0
  %v215 = vadd.f32 %v213, %v214
  %v216 = vsel %vm212, %v210, 0.0
  %v217 = vadd.f32 %v215, %v216
  %v218 = vsel %vm212, %v211, 0.0
  %v219 = vadd.f32 %v217, %v218
  %220 = vadd.xlane.f32.xlu0 %v219
  %v221 = vpop.xlane.xlu0 %220
  %v222 = vrot.slane %v221, 4
  %v223 = vadd.f32 %v221, %v222
  %v224 = vrot.slane %v223, 2
  %v225 = vadd.f32 %v223, %v224
  %v226 = vrot.slane %v225, 1
  %v227 = vadd.f32 %v225, %v226
  %s228 = vtos %v227
  %v229 = vsel %vm212, %v151, 0.0
  %v230 = vsel %vm212, %v152, 0.0
  %v231 = vadd.f32 %v229, %v230
  %v232 = vsel %vm212, %v153, 0.0
  %v233 = vadd.f32 %v231, %v232
  %v234 = vsel %vm212, %v154, 0.0
  %v235 = vadd.f32 %v233, %v234
  %236 = vadd.xlane.f32.xlu0 %v235
  %v237 = vpop.xlane.xlu0 %236
  %v238 = vrot.slane %v237, 4
  %v239 = vadd.f32 %v237, %v238
  %v240 = vrot.slane %v239, 2
  %v241 = vadd.f32 %v239, %v240
  %v242 = vrot.slane %v241, 1
  %v243 = vadd.f32 %v241, %v242
  %s244 = vtos %v243
  %v245 = vlaneseq
  %v246 = vand.u32 %v245, 127
  %vm247 = vcmp.eq.s32.totalorder %v246, 0
  %vm248 = vcmp.eq.s32.totalorder %v246, 1
  %vm249 = vcmp.eq.s32.totalorder %v246, 2
  %v250 = vstv %s244
  %v251 = vsel %vm249, %v250, 0.0
  %v252 = vstv %s228
  %v253 = vsel %vm248, %v252, %v251
  %v254 = vstv %s207
  %v255 = vsel %vm247, %v254, %v253
  %256 = vst [vmem:[%s5] sm:$0x1] %v255
  // Predicated region
  $region18: #{dynamicvit_distillation_loss.2} parent=0 // pred_check
    _
  $region19: #{dynamicvit_distillation_loss.2} parent=0 // pred_check_branch
    %258 = sbr.rel (0) target = $region21
  $region20: #{dynamicvit_distillation_loss.2} parent=0 // pred_region
    _
  $region21: #{dynamicvit_distillation_loss.2} parent=0 // pred_fallthru
    _
  // Predicated region
  $region22: #{dynamicvit_distillation_loss.2} parent=0 // pred_check
    _
  $region23: #{dynamicvit_distillation_loss.2} parent=0 // pred_check_branch
    %260 = sbr.rel (0) target = $region25
  $region24: #{dynamicvit_distillation_loss.2} parent=0 // pred_region
    _
  $region25: #{dynamicvit_distillation_loss.2} parent=0 // pred_fallthru
    _
  // Predicated region
  $region26: #{dynamicvit_distillation_loss.2} parent=0 // pred_check
    _
  $region27: #{dynamicvit_distillation_loss.2} parent=0 // pred_check_branch
    %262 = sbr.rel (0) target = $region29
  $region28: #{dynamicvit_distillation_loss.2} parent=0 // pred_region
    _
  $region29: #{dynamicvit_distillation_loss.2} parent=0 // pred_fallthru
    _
  // Predicated region
  $region30: #{dynamicvit_distillation_loss.2} parent=0 // pred_check
    _
  $region31: #{dynamicvit_distillation_loss.2} parent=0 // pred_check_branch
    %264 = sbr.rel (0) target = $region33
  $region32: #{dynamicvit_distillation_loss.2} parent=0 // pred_region
    _
  $region33: #{dynamicvit_distillation_loss.2} parent=0 // pred_fallthru
    _

// kernel: dynamicvit_distillation_loss.3
$region0: #{dynamicvit_distillation_loss.3}
  #allocation0 [shape = 'u32[]', space=smem, size = 0x4, offset = 0x4, fixed_abs, tag = 'smem constant byte address 0x4 - core index']
  #allocation1 [shape = 'u32[72,128]{1,0:T(1,128)}', space=vmem, size = 0x9000, scoped, tag = 'internal scratch']
  %s0 = inlined_call_operand.vmem [shape: f32[2,128], index: 0, kind: input, shape index: {}]
  %s1 = inlined_call_operand.vmem [shape: f32[2,128], index: 1, kind: input, shape index: {}]
  %s2 = inlined_call_operand.vmem [shape: f32[2,1,128], index: 2, kind: input, shape index: {}]
  %s3 = inlined_call_operand.vmem [shape: f32[128,128], index: 3, kind: input, shape index: {}]
  %s4 = inlined_call_operand.vmem [shape: f32[2,2,16], index: 4, kind: input, shape index: {}]
  %s5 = inlined_call_operand.vmem [shape: f32[2,1], index: 5, kind: input, shape index: {}]
  %s6 = inlined_call_operand.vmem [shape: f32[1,1,128], index: 6, kind: input, shape index: {}]
  %s7 = inlined_call_operand.hbm [shape: f32[1,1], index: 7, kind: output, shape index: {}]
  %s8 = sld [smem:[#allocation0]]
  $region38: #{dynamicvit_distillation_loss.3} parent=0
    _
  %s10 = ssub.s32 1, %s8
  %s11 = scalar_select 0, %s10, %s8
  $region1: #{dynamicvit_distillation_loss.3} parent=0
    #allocation2 [shape = 'u8[512]{0}', space=smem, size = 0x200, scoped, tag = 'output window, operand 0, single buffered']
    #allocation3 [shape = 's32[1]{0}', space=sflag, size = 0x4, scoped, tag = 'scoped memory for dynamicvit_distillation_loss.3']
    %12 = vsyncpa [#allocation3], 0
    // Predicated region
    $region2: #{dynamicvit_distillation_loss.3} parent=1 // pred_check
      _
    $region3: #{dynamicvit_distillation_loss.3} parent=1 // pred_check_branch
      %14 = sbr.rel (0) target = $region5
    $region4: #{dynamicvit_distillation_loss.3} parent=1 // pred_region
      _
    $region5: #{dynamicvit_distillation_loss.3} parent=1 // pred_fallthru
      _
    // Predicated region
    $region6: #{dynamicvit_distillation_loss.3} parent=1 // pred_check
      _
    $region7: #{dynamicvit_distillation_loss.3} parent=1 // pred_check_branch
      %16 = sbr.rel (0) target = $region9
    $region8: #{dynamicvit_distillation_loss.3} parent=1 // pred_region
      _
    $region9: #{dynamicvit_distillation_loss.3} parent=1 // pred_fallthru
      _
    // Predicated region
    $region10: #{dynamicvit_distillation_loss.3} parent=1 // pred_check
      _
    $region11: #{dynamicvit_distillation_loss.3} parent=1 // pred_check_branch
      %18 = sbr.rel (0) target = $region13
    $region12: #{dynamicvit_distillation_loss.3} parent=1 // pred_region
      _
    $region13: #{dynamicvit_distillation_loss.3} parent=1 // pred_fallthru
      _
    // Predicated region
    $region14: #{dynamicvit_distillation_loss.3} parent=1 // pred_check
      _
    $region15: #{dynamicvit_distillation_loss.3} parent=1 // pred_check_branch
      %20 = sbr.rel (0) target = $region17
    $region16: #{dynamicvit_distillation_loss.3} parent=1 // pred_region
      _
    $region17: #{dynamicvit_distillation_loss.3} parent=1 // pred_fallthru
      _
    // Predicated region
    $region18: #{dynamicvit_distillation_loss.3} parent=1 // pred_check
      _
    $region19: #{dynamicvit_distillation_loss.3} parent=1 // pred_check_branch
      %22 = sbr.rel (0) target = $region21
    $region20: #{dynamicvit_distillation_loss.3} parent=1 // pred_region
      _
    $region21: #{dynamicvit_distillation_loss.3} parent=1 // pred_fallthru
      _
    // Predicated region
    $region22: #{dynamicvit_distillation_loss.3} parent=1 // pred_check
      _
    $region23: #{dynamicvit_distillation_loss.3} parent=1 // pred_check_branch
      %24 = sbr.rel (0) target = $region25
    $region24: #{dynamicvit_distillation_loss.3} parent=1 // pred_region
      _
    $region25: #{dynamicvit_distillation_loss.3} parent=1 // pred_fallthru
      _
    // Predicated region
    $region26: #{dynamicvit_distillation_loss.3} parent=1 // pred_check
      _
    $region27: #{dynamicvit_distillation_loss.3} parent=1 // pred_check_branch
      %26 = sbr.rel (0) target = $region29
    $region28: #{dynamicvit_distillation_loss.3} parent=1 // pred_region
      _
    $region29: #{dynamicvit_distillation_loss.3} parent=1 // pred_fallthru
      _
    %v27 = vld [vmem:[%s0] sm:$0x3]
    %v28 = vld [vmem:[%s1] sm:$0x3]
    %v29 = vld [vmem:[%s2] sm:$0x1]
    %v30 = vld [vmem:[%s2 + $0x1] sm:$0x1]
    %v31 = vld [vmem:[%s4] sm:$0x3]
    %v32 = vld [vmem:[%s4 + $0x2] sm:$0x3]
    %v33 = vld [vmem:[%s6] sm:$0x1]
    %v34 = vld [vmem:[%s3] sm:$0xff]
    %v35 = vld [vmem:[%s3 + $0x8] sm:$0xff]
    %v36 = vld [vmem:[%s3 + $0x10] sm:$0xff]
    %v37 = vld [vmem:[%s3 + $0x18] sm:$0xff]
    %v38 = vld [vmem:[%s3 + $0x20] sm:$0xff]
    %v39 = vld [vmem:[%s3 + $0x28] sm:$0xff]
    %v40 = vld [vmem:[%s3 + $0x30] sm:$0xff]
    %v41 = vld [vmem:[%s3 + $0x38] sm:$0xff]
    %v42 = vld [vmem:[%s3 + $0x40] sm:$0xff]
    %v43 = vld [vmem:[%s3 + $0x48] sm:$0xff]
    %v44 = vld [vmem:[%s3 + $0x50] sm:$0xff]
    %v45 = vld [vmem:[%s3 + $0x58] sm:$0xff]
    %v46 = vld [vmem:[%s3 + $0x60] sm:$0xff]
    %v47 = vld [vmem:[%s3 + $0x68] sm:$0xff]
    %v48 = vld [vmem:[%s3 + $0x70] sm:$0xff]
    %v49 = vld [vmem:[%s3 + $0x78] sm:$0xff]
    %52 = vst [vmem:[#allocation1] ss:$9 sm:$0xff] %v29
    %s53 = scalar_lea.vmem [#allocation1], 1
    %54 = vst [vmem:[%s53] ss:$9 sm:$0xff] %v30
    %v55 = vld [vmem:[#allocation1] sm:$0xff]
    %57 = vmatpush.msra.mxu0 %v49
    %58 = vmatpush.msra.mxu0 %v48
    %59 = vmatpush.msra.mxu0 %v47
    %60 = vmatpush.msra.mxu0 %v46
    %61 = vmatpush.msra.mxu0 %v45
    %62 = vmatpush.msra.mxu0 %v44
    %63 = vmatpush.msra.mxu0 %v43
    %64 = vmatpush.msra.mxu0 %v42
    %65 = vmatpush.msra.mxu0 %v41
    %66 = vmatpush.msra.mxu0 %v40
    %67 = vmatpush.msra.mxu0 %v39
    %68 = vmatpush.msra.mxu0 %v38
    %69 = vmatpush.msra.mxu0 %v37
    %70 = vmatpush.msra.mxu0 %v36
    %71 = vmatpush.msra.mxu0 %v35
    %72 = vmatpush.msra.mxu0 %v34
    %73 = vmatmul.f32.gmra.mxu0 %v55
    %v74 = vpop.f32.mrf.mxu0
    %v75 = vadd.f32 0.0, %v74
    %76 = vdwg.mxu0
    %v77 = vlaneseq
    %v78 = vand.u32 %v77, 127
    %vm79 = vcmp.lt.s32.totalorder %v78, 16
    %v80 = vsel %vm79, 1, 0
    %vm81 = vcmp.eq.s32.totalorder %v80, 1
    %v82 = vsel %vm81, %v27, -1e+30
    %vm83 = vcmask 1041408
    %v84 = vsel %vm83, %v82, -inf
    %85 = vmax.xlane.f32.xlu0 %v84
    %v86 = vpop.xlane.xlu0 %85
    %v87 = vsub.f32 %v82, %v86
    %v88 = vmul.f32 %v87, 1.442695
    %v89 = vpow.pop %v88
    %v90 = vsel %vm81, %v89, 0.0
    %v91 = vsel %vm83, %v90, 0.0
    %92 = vadd.xlane.f32.xlu0 %v91
    %v93 = vpop.xlane.xlu0 %92
    %v94 = vlog2.pop %v93
    %v95 = vmul.f32 %v94, 0.6931472
    %v96 = vadd.f32 %v86, %v95
    %v97 = vsub.f32 %v27, %v96
    %v98 = vmul.f32 %v28, %v97
    %v99 = vsel %vm83, %v98, 0.0
    %100 = vadd.xlane.f32.xlu0 %v99
    %v101 = vpop.xlane.xlu0 %100
    %v102 = vrot.slane %v101, 4
    %v103 = vadd.f32 %v101, %v102
    %v104 = vrot.slane %v103, 2
    %v105 = vadd.f32 %v103, %v104
    %v106 = vrot.slane %v105, 1
    %v107 = vadd.f32 %v105, %v106
    %s108 = vtos %v107
    %s109 = ssub.f32 0.0, %s108
    %v110 = vrcp.pop 2.0
    %v111 = vmul.f32 2.0, %v110
    %v112 = vsub.f32 1.0, %v111
    %v113 = vmul.f32 %v110, %v112
    %v114 = vadd.f32 %v110, %v113
    %vm115 = vweird.f32 %v110
    %v116 = vsel %vm115, %v110, %v114
    %s117 = vtos %v116
    %s118 = smul.f32 %s109, %s117
    %vm119 = vcmask 123904
    %v120 = vsel %vm119, %v31, 0.0
    %121 = vadd.xlane.f32.xlu0 %v120
    %v122 = vpop.xlane.xlu0 %121
    %v123 = vsel %vm119, %v32, 0.0
    %124 = vadd.xlane.f32.xlu0 %v123
    %v125 = vpop.xlane.xlu0 %124
    %v126 = vrcp.pop 16.0
    %v127 = vmul.f32 16.0, %v126
    %v128 = vsub.f32 1.0, %v127
    %v129 = vmul.f32 %v126, %v128
    %v130 = vadd.f32 %v126, %v129
    %vm131 = vweird.f32 %v126
    %v132 = vsel %vm131, %v126, %v130
    %v133 = vmul.f32 %v122, %v132
    %v134 = vmul.f32 %v125, %v132
    %v135 = vld [vmem:[%s5] sm:$0x3]
    %137 = vset.pattern.permute.xlu0 0
    %138 = vperm.xlu0 %137, %v135
    %v139 = vpop.permute.xlu0 %138
    %v140 = vperm.slane %v139, 0
    %v141 = vperm.slane %v139, 1
    %v144 = vsub.f32 %v133, %v140
    %v145 = vsub.f32 %v134, %v141
    %v146 = vmul.f32 %v144, %v144
    %v147 = vmul.f32 %v145, %v145
    %150 = vset.pattern.permute.xlu0 0
    %151 = vperm.xlu0 %150, %v146
    %v152 = vpop.permute.xlu0 %151
    %153 = vset.pattern.permute.xlu0 0
    %154 = vperm.xlu0 %153, %v147
    %v155 = vpop.permute.xlu0 %154
    %v156 = vperm.slane %v152, %v78
    %v157 = vperm.slane %v155, %v78
    %vm158 = vcmask 1041409
    %v159 = vsel %vm158, %v157, %v156
    %vm161 = vcmask 9216
    %v162 = vsel %vm161, %v159, 0.0
    %163 = vadd.xlane.f32.xlu0 %v162
    %v164 = vpop.xlane.xlu0 %163
    %v165 = vrot.slane %v164, 4
    %v166 = vadd.f32 %v164, %v165
    %v167 = vrot.slane %v166, 2
    %v168 = vadd.f32 %v166, %v167
    %v169 = vrot.slane %v168, 1
    %v170 = vadd.f32 %v168, %v169
    %s171 = vtos %v170
    %v172 = vrcp.pop 4.0
    %v173 = vmul.f32 4.0, %v172
    %v174 = vsub.f32 1.0, %v173
    %v175 = vmul.f32 %v172, %v174
    %v176 = vadd.f32 %v172, %v175
    %vm177 = vweird.f32 %v172
    %v178 = vsel %vm177, %v172, %v176
    %s179 = vtos %v178
    %s180 = smul.f32 %s171, %s179
    %s181 = smul.f32 %s180, 2.0
    %s182 = sadd.f32 %s118, %s181
    %v183 = vsel %vm81, %v75, -1e+30
    %v184 = vsel %vm83, %v183, -inf
    %185 = vmax.xlane.f32.xlu0 %v184
    %v186 = vpop.xlane.xlu0 %185
    %v187 = vsub.f32 %v183, %v186
    %v188 = vmul.f32 %v187, 1.442695
    %v189 = vpow.pop %v188
    %v190 = vsel %vm81, %v189, 0.0
    %v191 = vsel %vm83, %v190, 0.0
    %192 = vadd.xlane.f32.xlu0 %v191
    %v193 = vpop.xlane.xlu0 %192
    %v194 = vlog2.pop %v193
    %v195 = vmul.f32 %v194, 0.6931472
    %v196 = vadd.f32 %v186, %v195
    %v197 = vsub.f32 %v75, %v196
    %v198 = vrcp.pop %v193
    %v199 = vmul.f32 %v193, %v198
    %v200 = vsub.f32 1.0, %v199
    %v201 = vmul.f32 %v198, %v200
    %v202 = vadd.f32 %v198, %v201
    %vm203 = vweird.f32 %v193
    %vm204 = vweird.f32 %v198
    %vm205 = vmor %vm203, %vm204
    %v206 = vsel %vm205, %v198, %v202
    %v207 = vand.u32 2147483647, %v193
    %vm208 = vcmp.eq.f32.partialorder %v207, 8.507059e+37
    %v209 = vand.u32 %v193, 2147483648
    %v210 = vor.u32 1.1754944e-38, %v209
    %v211 = vsel %vm208, %v210, %v206
    %v212 = vmul.f32 %v190, %v211
    %v213 = vsub.f32 %v197, %v97
    %v214 = vmul.f32 %v212, %v213
    %v215 = vsel %vm83, %v214, 0.0
    %216 = vadd.xlane.f32.xlu0 %v215
    %v217 = vpop.xlane.xlu0 %216
    %v218 = vrot.slane %v217, 4
    %v219 = vadd.f32 %v217, %v218
    %v220 = vrot.slane %v219, 2
    %v221 = vadd.f32 %v219, %v220
    %v222 = vrot.slane %v221, 1
    %v223 = vadd.f32 %v221, %v222
    %s224 = vtos %v223
    %v225 = vrcp.pop 2.0
    %v226 = vmul.f32 2.0, %v225
    %v227 = vsub.f32 1.0, %v226
    %v228 = vmul.f32 %v225, %v227
    %v229 = vadd.f32 %v225, %v228
    %vm230 = vweird.f32 %v225
    %v231 = vsel %vm230, %v225, %v229
    %s232 = vtos %v231
    %s233 = smul.f32 %s224, %s232
    %s234 = smul.f32 %s233, 0.5
    %s235 = sadd.f32 %s182, %s234
    %v236 = vadd.f32 %v33, 0.0
    %s237 = vtos %v236
    %239 = vrot.lane.b32.xlu0 %v236, 127
    %v240 = vpop.permute.xlu0 %239
    %s242 = vtos %v240
    %243 = vrot.lane.b32.xlu0 %v236, 126
    %v244 = vpop.permute.xlu0 %243
    %s246 = vtos %v244
    %s247 = smax.f32 %s242, 1.0
    %s248 = smul.f32 %s247, 32.0
    %v249 = vstv %s248
    %v250 = vrcp.pop %v249
    %v251 = vmul.f32 %v249, %v250
    %v252 = vsub.f32 1.0, %v251
    %v253 = vmul.f32 %v250, %v252
    %v254 = vadd.f32 %v250, %v253
    %vm255 = vweird.f32 %v249
    %vm256 = vweird.f32 %v250
    %vm257 = vmor %vm255, %vm256
    %v258 = vsel %vm257, %v250, %v254
    %v259 = vand.u32 2147483647, %v249
    %vm260 = vcmp.eq.f32.partialorder %v259, 8.507059e+37
    %v261 = vand.u32 %v249, 2147483648
    %v262 = vor.u32 1.1754944e-38, %v261
    %v263 = vsel %vm260, %v262, %v258
    %s264 = vtos %v263
    %s265 = smul.f32 %s237, %s264
    %p266 = scmp.lt.f32.partialorder %s246, 0.1
    %s267 = smul.f32 %s265, 0.5
    %s268 = scalar_select %p266, 0.0, %s267
    %s269 = sadd.f32 %s235, %s268
    %s270 = scalar_lea.smem [#allocation2], 0
    %271 = sst [smem:[%s270]] %s269
    // Predicated region
    $region30: #{dynamicvit_distillation_loss.3} parent=1 // pred_check
      _
    $region31: #{dynamicvit_distillation_loss.3} parent=1 // pred_check_branch
      %273 = sbr.rel (0) target = $region33
    $region32: #{dynamicvit_distillation_loss.3} parent=1 // pred_region
      %275 = vsyncadd [#allocation3], 0
      %s277 = sshll.u32 %s7, 4
      %s278 = int_to_ptr.hbm [resolvable:$true] %s277
      %280 = dma.smem_to_hbm [#allocation2], 16, %s278, [#allocation3]
    $region33: #{dynamicvit_distillation_loss.3} parent=1 // pred_fallthru
      _
    // Predicated region
    $region34: #{dynamicvit_distillation_loss.3} parent=1 // pred_check
      _
    $region35: #{dynamicvit_distillation_loss.3} parent=1 // pred_check_branch
      %282 = sbr.rel (0) target = $region37
    $region36: #{dynamicvit_distillation_loss.3} parent=1 // pred_region
      %284 = dma.done [#allocation3], 16
    $region37: #{dynamicvit_distillation_loss.3} parent=1 // pred_fallthru
      _
    %285 = sfence
    %286 = vsyncpa [#allocation3], 1

</llo_original>
